<compile_context>
chip_gen: v5e
topology: v5e:2x2
jax: 0.10.0
libtpu: 0.0.40
codegen_flags: <defaults>
</compile_context>

<pallas_src>
import jax
import jax.numpy as jnp
from jax import lax
from jax.experimental import pallas as pl
from jax.experimental.pallas import tpu as pltpu

NEG_SLOPE = 0.2
_NEG_BIG = -1e30   # finite "minus infinity" so 0 * _NEG_BIG == 0 inside the gather matmul

# dot_general dimension numbers (2-D, no batch)
_GATHER_DN = (((0,), (0,)), ((), ()))    # [N,1] x [N,E] -> [1,E]  (contract node axis)
_SCATTER_DN = (((1,), (1,)), ((), ()))   # [N,E] x [1,E] -> [N,1]  (contract edge axis)


def _attention_kernel(xt_ref, att_ref, row_ref, col_ref, out_ref):
    # xt_ref  : [C, N]  node features, pre-transposed (nodes on lanes)
    # att_ref : [2, C]  row 0 = att[:C], row 1 = att[C:]
    # row_ref : [1, E]  int32 source node per edge (lane-dense, padded with N)
    # col_ref : [1, E]  int32 target node per edge (lane-dense, padded with N)
    # out_ref : [1, E]  softmax attention coefficient per edge (lane-dense)
    x_t = xt_ref[...].astype(jnp.float32)                     # [C, N]
    att = att_ref[...].astype(jnp.float32)                    # [2, C]
    N = x_t.shape[1]
    E = out_ref.shape[1]

    # Per-node partial scores on the MXU:
    #   s_t[0, n] = att[:C] . x_n ,  s_t[1, n] = att[C:] . x_n
    s_t = jnp.dot(att, x_t, preferred_element_type=jnp.float32)   # [2, N]

    # One-hot edge->node membership (float 0/1), reused by every gather/scatter.
    # TODO(synk): keep these masks in bf16 at production N*E (exact 0/1, half VMEM).
    row = row_ref[...]                                             # [1, E]
    col = col_ref[...]                                             # [1, E]
    node_iota = lax.broadcasted_iota(jnp.int32, (N, E), 0)         # [N, E]
    row_hit = node_iota == row                                     # [N, E] bool
    row_oh = row_hit.astype(jnp.float32)                           # [N, E]
    col_oh = (node_iota == col).astype(jnp.float32)                # [N, E]

    # Gather per-edge raw score via one-hot matmuls (MXU):
    #   alpha_e = att[:C].x[row_e] + att[C:].x[col_e]
    alpha = (jnp.dot(s_t[0:1, :], row_oh, preferred_element_type=jnp.float32)
             + jnp.dot(s_t[1:2, :], col_oh, preferred_element_type=jnp.float32))  # [1, E]

    # leaky_relu
    alpha = jnp.where(alpha >= 0, alpha, jnp.float32(NEG_SLOPE) * alpha)

    # Segment softmax over edges sharing the same `row` node.
    # Per-node max is the only reduction that cannot be a matmul (masked XLU reduce).
    m_node = jnp.max(jnp.where(row_hit, alpha, jnp.float32(_NEG_BIG)),
                     axis=1, keepdims=True)                                      # [N, 1]
    m_edge = lax.dot_general(m_node, row_oh, _GATHER_DN,
                             preferred_element_type=jnp.float32)                 # [1, E]
    ex = jnp.exp(alpha - m_edge)                                                 # [1, E]

    # Scatter-add exp to nodes, then gather the per-node denominator back (both MXU).
    s_node = lax.dot_general(row_oh, ex, _SCATTER_DN,
                             preferred_element_type=jnp.float32)                 # [N, 1]
    d_edge = lax.dot_general(s_node, row_oh, _GATHER_DN,
                             preferred_element_type=jnp.float32)                 # [1, E]

    # Guard padded / dangling edges (all-zero one-hot column -> zero denominator),
    # then normalize on the EUP approximate-reciprocal path.
    denom = jnp.where(d_edge > 0.0, d_edge, jnp.float32(1.0))
    out_ref[...] = ex * pl.reciprocal(denom, approx=True)


@jax.jit
def custom_attention_layer(x, edge_index, att):
    """Pallas implementation of CustomAttentionLayer.forward.

    x          : [N, C] float32 node features
    edge_index : [2, E] int32 (row, col)
    att        : [2C, 1] float32 attention parameter
    returns    : [1, E] float32 segment-softmax attention coefficients
    """
    N, C = x.shape
    E = edge_index.shape[1]
    E_pad = ((E + 127) // 128) * 128                     # lane-dense edge axis

    x_t = x.astype(jnp.float32).T                        # [C, N]  layout plumbing only
    att_rows = att.astype(jnp.float32).reshape(2, C)     # row 0 = att[:C], row 1 = att[C:]
    # Pad edges with sentinel node index N (matches no node -> zero one-hot column).
    row = jnp.pad(edge_index[0].astype(jnp.int32), (0, E_pad - E),
                  constant_values=N).reshape(1, E_pad)
    col = jnp.pad(edge_index[1].astype(jnp.int32), (0, E_pad - E),
                  constant_values=N).reshape(1, E_pad)

    out = pl.pallas_call(
        _attention_kernel,
        out_shape=jax.ShapeDtypeStruct((1, E_pad), jnp.float32),
        in_specs=[
            pl.BlockSpec(memory_space=pltpu.MemorySpace.VMEM),  # x_t
            pl.BlockSpec(memory_space=pltpu.MemorySpace.VMEM),  # att rows
            pl.BlockSpec(memory_space=pltpu.MemorySpace.VMEM),  # row
            pl.BlockSpec(memory_space=pltpu.MemorySpace.VMEM),  # col
        ],
        out_specs=pl.BlockSpec(memory_space=pltpu.MemorySpace.VMEM),
    )(x_t, att_rows, row, col)
    return out[:, :E]


def _reference(x, edge_index, att, num_nodes):
    """Pure-JAX reference matching the torch semantics."""
    row, col = edge_index[0], edge_index[1]
    xcat = jnp.concatenate([x[row], x[col]], axis=-1)
    alpha = xcat @ att                                      # [E, 1]
    alpha = jnp.where(alpha >= 0, alpha, NEG_SLOPE * alpha)
    a = alpha[:, 0]                                         # [E]
    seg_max = jax.ops.segment_max(a, row, num_segments=num_nodes)
    ex = jnp.exp(a - seg_max[row])
    seg_sum = jax.ops.segment_sum(ex, row, num_segments=num_nodes)
    sm = ex / seg_sum[row]
    return sm.reshape(1, -1)


if __name__ == "__main__":
    key = jax.random.PRNGKey(0)
    k1, k2, k3, k4 = jax.random.split(key, 4)

    N = 16          # nodes
    C = 8           # in_channels
    E = 32          # edges

    x = jax.random.normal(k1, (N, C), dtype=jnp.float32)
    row = jax.random.randint(k2, (E,), 0, N, dtype=jnp.int32)
    col = jax.random.randint(k3, (E,), 0, N, dtype=jnp.int32)
    edge_index = jnp.stack([row, col], axis=0)              # [2, E]

    # Deterministic xavier_uniform-style init for att: shape [2C, 1]
    fan_in, fan_out = 2 * C, 1
    bound = (6.0 / (fan_in + fan_out)) ** 0.5
    att = jax.random.uniform(k4, (2 * C, 1), dtype=jnp.float32,
                             minval=-bound, maxval=bound)

    out = custom_attention_layer(x, edge_index, att)
    out = jax.block_until_ready(out)

    ref = _reference(x, edge_index, att, N)
    assert out.shape == (1, E)
    # Tolerance accounts for the EUP approximate reciprocal (~1e-4 relative error).
    assert jnp.allclose(out, ref, atol=2e-3, rtol=2e-3), \
        f"mismatch: max abs diff {jnp.max(jnp.abs(out - ref))}"

    print("KERNEL_OK")
</pallas_src>

<mosaic_0001>
module attributes {stable_mosaic.version = 11 : i64} {
  func.func @_attention_kernel(%arg0: memref<8x16xf32, #tpu.memory_space<vmem>>, %arg1: memref<2x8xf32, #tpu.memory_space<vmem>>, %arg2: memref<1x128xi32, #tpu.memory_space<vmem>>, %arg3: memref<1x128xi32, #tpu.memory_space<vmem>>, %arg4: memref<1x128xf32, #tpu.memory_space<vmem>>) attributes {dimension_semantics = [], scalar_prefetch = 0 : i64, scratch_operands = 0 : i64, tpu.core_type = #tpu.core_type<tc>} {
    %c0 = arith.constant 0 : index
    %c0_0 = arith.constant 0 : index
    %0 = vector.load %arg0[%c0, %c0_0] : memref<8x16xf32, #tpu.memory_space<vmem>>, vector<8x16xf32>
    %c0_1 = arith.constant 0 : index
    %c0_2 = arith.constant 0 : index
    %1 = vector.load %arg1[%c0_1, %c0_2] : memref<2x8xf32, #tpu.memory_space<vmem>>, vector<2x8xf32>
    %cst = arith.constant dense<0.000000e+00> : vector<2x16xf32>
    %2 = tpu.matmul %1, %0, %cst {dimension_numbers = #tpu.dot_dimension_numbers<[1], [0], [0], [1], [0, 0, 1, 1], [], []>} : vector<2x8xf32>, vector<8x16xf32>, vector<2x16xf32> -> vector<2x16xf32>
    %c0_3 = arith.constant 0 : index
    %c0_4 = arith.constant 0 : index
    %3 = vector.load %arg2[%c0_3, %c0_4] : memref<1x128xi32, #tpu.memory_space<vmem>>, vector<1x128xi32>
    %c0_5 = arith.constant 0 : index
    %c0_6 = arith.constant 0 : index
    %4 = vector.load %arg3[%c0_5, %c0_6] : memref<1x128xi32, #tpu.memory_space<vmem>>, vector<1x128xi32>
    %5 = tpu.iota {dimensions = array<i32: 0>} : vector<16x128xi32>
    %6 = vector.broadcast %3 : vector<1x128xi32> to vector<16x128xi32>
    %7 = arith.cmpi eq, %5, %6 : vector<16x128xi32>
    %8 = arith.extui %7 : vector<16x128xi1> to vector<16x128xi32>
    %9 = arith.sitofp %8 : vector<16x128xi32> to vector<16x128xf32>
    %10 = vector.broadcast %4 : vector<1x128xi32> to vector<16x128xi32>
    %11 = arith.cmpi eq, %5, %10 : vector<16x128xi32>
    %12 = arith.extui %11 : vector<16x128xi1> to vector<16x128xi32>
    %13 = arith.sitofp %12 : vector<16x128xi32> to vector<16x128xf32>
    %14 = vector.extract_strided_slice %2 {offsets = [0, 0], sizes = [1, 16], strides = [1, 1]} : vector<2x16xf32> to vector<1x16xf32>
    %cst_7 = arith.constant dense<0.000000e+00> : vector<1x128xf32>
    %15 = tpu.matmul %14, %9, %cst_7 {dimension_numbers = #tpu.dot_dimension_numbers<[1], [0], [0], [1], [0, 0, 1, 1], [], []>} : vector<1x16xf32>, vector<16x128xf32>, vector<1x128xf32> -> vector<1x128xf32>
    %16 = vector.extract_strided_slice %2 {offsets = [1, 0], sizes = [1, 16], strides = [1, 1]} : vector<2x16xf32> to vector<1x16xf32>
    %cst_8 = arith.constant dense<0.000000e+00> : vector<1x128xf32>
    %17 = tpu.matmul %16, %13, %cst_8 {dimension_numbers = #tpu.dot_dimension_numbers<[1], [0], [0], [1], [0, 0, 1, 1], [], []>} : vector<1x16xf32>, vector<16x128xf32>, vector<1x128xf32> -> vector<1x128xf32>
    %18 = arith.addf %15, %17 : vector<1x128xf32>
    %cst_9 = arith.constant 0.000000e+00 : f32
    %19 = vector.broadcast %cst_9 : f32 to vector<1x128xf32>
    %20 = arith.cmpf oge, %18, %19 : vector<1x128xf32>
    %cst_10 = arith.constant 2.000000e-01 : f32
    %21 = vector.broadcast %cst_10 : f32 to vector<1x128xf32>
    %22 = arith.mulf %21, %18 : vector<1x128xf32>
    %23 = arith.select %20, %18, %22 : vector<1x128xi1>, vector<1x128xf32>
    %cst_11 = arith.constant -1.000000e+30 : f32
    %24 = vector.shape_cast %23 : vector<1x128xf32> to vector<1x128xf32>
    %25 = vector.broadcast %24 : vector<1x128xf32> to vector<16x128xf32>
    %26 = vector.broadcast %cst_11 : f32 to vector<16x128xf32>
    %27 = arith.select %7, %25, %26 : vector<16x128xi1>, vector<16x128xf32>
    %cst_12 = arith.constant dense<0xFF800000> : vector<16xf32>
    %28 = vector.multi_reduction <maximumf>, %27, %cst_12 [1] : vector<16x128xf32> to vector<16xf32>
    %29 = vector.shape_cast %28 : vector<16xf32> to vector<16x1xf32>
    %cst_13 = arith.constant dense<0.000000e+00> : vector<1x128xf32>
    %30 = tpu.matmul %29, %9, %cst_13 {dimension_numbers = #tpu.dot_dimension_numbers<[0], [0], [1], [1], [0, 1, 1, 1], [], []>} : vector<16x1xf32>, vector<16x128xf32>, vector<1x128xf32> -> vector<1x128xf32>
    %31 = arith.subf %23, %30 : vector<1x128xf32>
    %32 = math.exp %31 : vector<1x128xf32>
    %cst_14 = arith.constant dense<0.000000e+00> : vector<16x1xf32>
    %33 = tpu.matmul %9, %32, %cst_14 {dimension_numbers = #tpu.dot_dimension_numbers<[1], [1], [0], [0], [0, 0, 1, 0], [], []>} : vector<16x128xf32>, vector<1x128xf32>, vector<16x1xf32> -> vector<16x1xf32>
    %cst_15 = arith.constant dense<0.000000e+00> : vector<1x128xf32>
    %34 = tpu.matmul %33, %9, %cst_15 {dimension_numbers = #tpu.dot_dimension_numbers<[0], [0], [1], [1], [0, 1, 1, 1], [], []>} : vector<16x1xf32>, vector<16x128xf32>, vector<1x128xf32> -> vector<1x128xf32>
    %cst_16 = arith.constant 0.000000e+00 : f32
    %35 = vector.broadcast %cst_16 : f32 to vector<1x128xf32>
    %36 = arith.cmpf ogt, %34, %35 : vector<1x128xf32>
    %cst_17 = arith.constant 1.000000e+00 : f32
    %37 = vector.broadcast %cst_17 : f32 to vector<1x128xf32>
    %38 = arith.select %36, %34, %37 : vector<1x128xi1>, vector<1x128xf32>
    %39 = tpu.reciprocal %38 {approx = true} : vector<1x128xf32> -> vector<1x128xf32>
    %40 = arith.mulf %32, %39 : vector<1x128xf32>
    %c0_18 = arith.constant 0 : index
    %c0_19 = arith.constant 0 : index
    %41 = vector.load %arg4[%c0_18, %c0_19] : memref<1x128xf32, #tpu.memory_space<vmem>>, vector<1x128xf32>
    tpu.vector_store %arg4[%c0_18, %c0_19], %40 {strides = array<i32>} : memref<1x128xf32, #tpu.memory_space<vmem>>, vector<1x128xf32>,
    return
  }
}

</mosaic_0001>

<llo_original>
// kernel: custom_attention_layer.1
$region0: #{custom_attention_layer.1}
  #allocation0 [shape = 'u32[]', space=smem, size = 0x4, offset = 0x4, fixed_abs, tag = 'smem constant byte address 0x4 - core index']
  #allocation1 [shape = 'u32[72,128]{1,0:T(1,128)}', space=vmem, size = 0x9000, scoped, tag = 'internal scratch']
  %s0 = inlined_call_operand.vmem [shape: f32[8,16], index: 0, kind: input, shape index: {}]
  %s1 = inlined_call_operand.vmem [shape: f32[2,8], index: 1, kind: input, shape index: {}]
  %s2 = inlined_call_operand.vmem [shape: s32[1,128], index: 2, kind: input, shape index: {}]
  %s3 = inlined_call_operand.vmem [shape: s32[1,128], index: 3, kind: input, shape index: {}]
  %s4 = inlined_call_operand.hbm [shape: f32[1,128], index: 4, kind: output, shape index: {}]
  %s5 = sld [smem:[#allocation0]]
  $region26: #{custom_attention_layer.1} parent=0
    _
  %s7 = ssub.s32 1, %s5
  %s8 = scalar_select 0, %s7, %s5
  $region1: #{custom_attention_layer.1} parent=0
    #allocation2 [shape = 'u8[512]{0}', space=vmem, size = 0x400, scoped, tag = 'output window, operand 0, single buffered']
    #allocation3 [shape = 's32[1]{0}', space=sflag, size = 0x4, scoped, tag = 'scoped memory for custom_attention_layer.1']
    %9 = vsyncpa [#allocation3], 0
    // Predicated region
    $region2: #{custom_attention_layer.1} parent=1 // pred_check
      _
    $region3: #{custom_attention_layer.1} parent=1 // pred_check_branch
      %11 = sbr.rel (0) target = $region5
    $region4: #{custom_attention_layer.1} parent=1 // pred_region
      _
    $region5: #{custom_attention_layer.1} parent=1 // pred_fallthru
      _
    // Predicated region
    $region6: #{custom_attention_layer.1} parent=1 // pred_check
      _
    $region7: #{custom_attention_layer.1} parent=1 // pred_check_branch
      %13 = sbr.rel (0) target = $region9
    $region8: #{custom_attention_layer.1} parent=1 // pred_region
      _
    $region9: #{custom_attention_layer.1} parent=1 // pred_fallthru
      _
    // Predicated region
    $region10: #{custom_attention_layer.1} parent=1 // pred_check
      _
    $region11: #{custom_attention_layer.1} parent=1 // pred_check_branch
      %15 = sbr.rel (0) target = $region13
    $region12: #{custom_attention_layer.1} parent=1 // pred_region
      _
    $region13: #{custom_attention_layer.1} parent=1 // pred_fallthru
      _
    // Predicated region
    $region14: #{custom_attention_layer.1} parent=1 // pred_check
      _
    $region15: #{custom_attention_layer.1} parent=1 // pred_check_branch
      %17 = sbr.rel (0) target = $region17
    $region16: #{custom_attention_layer.1} parent=1 // pred_region
      _
    $region17: #{custom_attention_layer.1} parent=1 // pred_fallthru
      _
    %v18 = vld [vmem:[%s0] sm:$0xff]
    %v19 = vld [vmem:[%s1] sm:$0x3]
    %vm20 = vcmask 64512
    %v22 = vsel %vm20, %v19, 0
    %24 = vmatpush.msra.mxu0 0.0
    %25 = vmatpush.msra.mxu0 0.0
    %26 = vmatpush.msra.mxu0 0.0
    %27 = vmatpush.msra.mxu0 0.0
    %28 = vmatpush.msra.mxu0 0.0
    %29 = vmatpush.msra.mxu0 0.0
    %30 = vmatpush.msra.mxu0 0.0
    %31 = vmatpush.msra.mxu0 0.0
    %32 = vmatpush.msra.mxu0 0.0
    %33 = vmatpush.msra.mxu0 0.0
    %34 = vmatpush.msra.mxu0 0.0
    %35 = vmatpush.msra.mxu0 0.0
    %36 = vmatpush.msra.mxu0 0.0
    %37 = vmatpush.msra.mxu0 0.0
    %38 = vmatpush.msra.mxu0 0.0
    %39 = vmatpush.msra.mxu0 %v18
    %40 = vmatmul.f32.gmra.mxu0 %v22
    %v41 = vpop.f32.mrf.mxu0
    %v42 = vadd.f32 0.0, %v41
    %43 = vdwg.mxu0
    %v44 = vld [vmem:[%s2] sm:$0x1]
    %v45 = vld [vmem:[%s3] sm:$0x1]
    %v46 = vlaneseq
    %v47 = vshrl.u32 %v46, 7
    %v48 = vadd.s32 %v47, 8
    %v49 = vperm.slane %v44, 0
    %vm50 = vcmp.eq.s32.totalorder %v47, %v49
    %vm51 = vcmp.eq.s32.totalorder %v48, %v49
    %v52 = vsel %vm50, 1, 0
    %v53 = vsel %vm51, 1, 0
    %v54 = vcvt.s32.f32 %v52
    %v55 = vcvt.s32.f32 %v53
    %v56 = vperm.slane %v45, 0
    %vm57 = vcmp.eq.s32.totalorder %v47, %v56
    %vm58 = vcmp.eq.s32.totalorder %v48, %v56
    %v59 = vsel %vm57, 1, 0
    %v60 = vsel %vm58, 1, 0
    %v61 = vcvt.s32.f32 %v59
    %v62 = vcvt.s32.f32 %v60
    %v64 = vrot.slane %v42, 1
    %vm65 = vcmask 130048
    %v66 = vsel %vm65, %v64, 0
    %68 = vmatpush.msra.mxu0 0.0
    %69 = vmatpush.msra.mxu0 0.0
    %70 = vmatpush.msra.mxu0 0.0
    %71 = vmatpush.msra.mxu0 0.0
    %72 = vmatpush.msra.mxu0 0.0
    %73 = vmatpush.msra.mxu0 0.0
    %74 = vmatpush.msra.mxu0 0.0
    %75 = vmatpush.msra.mxu0 0.0
    %76 = vmatpush.msra.mxu0 0.0
    %77 = vmatpush.msra.mxu0 0.0
    %78 = vmatpush.msra.mxu0 0.0
    %79 = vmatpush.msra.mxu0 0.0
    %80 = vmatpush.msra.mxu0 0.0
    %81 = vmatpush.msra.mxu0 0.0
    %82 = vmatpush.msra.mxu0 %v62
    %83 = vmatpush.msra.mxu0 %v61
    %84 = vmatmul.f32.gmra.mxu0 %v66
    %v85 = vpop.f32.mrf.mxu0
    %v86 = vadd.f32 0.0, %v85
    %87 = vdwg.mxu0
    %v88 = vsel %vm65, %v42, 0
    %90 = vmatpush.msra.mxu0 0.0
    %91 = vmatpush.msra.mxu0 0.0
    %92 = vmatpush.msra.mxu0 0.0
    %93 = vmatpush.msra.mxu0 0.0
    %94 = vmatpush.msra.mxu0 0.0
    %95 = vmatpush.msra.mxu0 0.0
    %96 = vmatpush.msra.mxu0 0.0
    %97 = vmatpush.msra.mxu0 0.0
    %98 = vmatpush.msra.mxu0 0.0
    %99 = vmatpush.msra.mxu0 0.0
    %100 = vmatpush.msra.mxu0 0.0
    %101 = vmatpush.msra.mxu0 0.0
    %102 = vmatpush.msra.mxu0 0.0
    %103 = vmatpush.msra.mxu0 0.0
    %104 = vmatpush.msra.mxu0 %v55
    %105 = vmatpush.msra.mxu0 %v54
    %106 = vmatmul.f32.gmra.mxu0 %v88
    %v107 = vpop.f32.mrf.mxu0
    %v108 = vadd.f32 %v86, %v107
    %109 = vdwg.mxu0
    %vm110 = vcmp.ge.f32.partialorder %v108, 0.0
    %v111 = vmul.f32 %v108, 0.2
    %v112 = vsel %vm110, %v108, %v111
    %v113 = vperm.slane %v112, 0
    %v114 = vsel %vm50, %v113, -1e+30
    %v115 = vsel %vm51, %v113, -1e+30
    %116 = vmax.xlane.f32.xlu0 %v114
    %v117 = vpop.xlane.xlu0 %116
    %118 = vmax.xlane.f32.xlu0 %v115
    %v119 = vpop.xlane.xlu0 %118
    %120 = vxpose.xlu0.b32.start [1/16] %v117, 128
    %121 = vxpose.xlu0.b32.cont [2/16] %v119, 128
    %122 = vxpose.xlu0.b32.cont [3/16] 0.0, 128
    %123 = vxpose.xlu0.b32.cont [4/16] 0.0, 128
    %124 = vxpose.xlu0.b32.cont [5/16] 0.0, 128
    %125 = vxpose.xlu0.b32.cont [6/16] 0.0, 128
    %126 = vxpose.xlu0.b32.cont [7/16] 0.0, 128
    %127 = vxpose.xlu0.b32.cont [8/16] 0.0, 128
    %128 = vxpose.xlu0.b32.cont [9/16] 0.0, 128
    %129 = vxpose.xlu0.b32.cont [10/16] 0.0, 128
    %130 = vxpose.xlu0.b32.cont [11/16] 0.0, 128
    %131 = vxpose.xlu0.b32.cont [12/16] 0.0, 128
    %132 = vxpose.xlu0.b32.cont [13/16] 0.0, 128
    %133 = vxpose.xlu0.b32.cont [14/16] 0.0, 128
    %134 = vxpose.xlu0.b32.cont [15/16] 0.0, 128
    %135 = vxpose.xlu0.b32.end [16/16] 0.0, 128
    %v136 = vpop.trf.xlu0
    %v137 = vpop.trf.xlu0
    %v138 = vpop.trf.xlu0
    %v139 = vpop.trf.xlu0
    %v140 = vpop.trf.xlu0
    %v141 = vpop.trf.xlu0
    %v142 = vpop.trf.xlu0
    %v143 = vpop.trf.xlu0
    %v144 = vpop.trf.xlu0
    %v145 = vpop.trf.xlu0
    %v146 = vpop.trf.xlu0
    %v147 = vpop.trf.xlu0
    %v148 = vpop.trf.xlu0
    %v149 = vpop.trf.xlu0
    %v150 = vpop.trf.xlu0
    %v151 = vpop.trf.xlu0
    %v153 = vsel %vm65, %v136, 0
    %155 = vmatpush.msra.mxu0 0.0
    %156 = vmatpush.msra.mxu0 0.0
    %157 = vmatpush.msra.mxu0 0.0
    %158 = vmatpush.msra.mxu0 0.0
    %159 = vmatpush.msra.mxu0 0.0
    %160 = vmatpush.msra.mxu0 0.0
    %161 = vmatpush.msra.mxu0 0.0
    %162 = vmatpush.msra.mxu0 0.0
    %163 = vmatpush.msra.mxu0 0.0
    %164 = vmatpush.msra.mxu0 0.0
    %165 = vmatpush.msra.mxu0 0.0
    %166 = vmatpush.msra.mxu0 0.0
    %167 = vmatpush.msra.mxu0 0.0
    %168 = vmatpush.msra.mxu0 0.0
    %169 = vmatpush.msra.mxu0 %v55
    %170 = vmatpush.msra.mxu0 %v54
    %171 = vmatmul.f32.gmra.mxu0 %v153
    %v172 = vpop.f32.mrf.mxu0
    %v173 = vadd.f32 0.0, %v172
    %174 = vdwg.mxu0
    %v175 = vsub.f32 %v112, %v173
    %v176 = vmul.f32 %v175, 1.442695
    %v177 = vpow.pop %v176
    %v178 = vperm.slane %v177, 0
    %v179 = vmul.f32 %v54, %v178
    %v180 = vmul.f32 %v55, %v178
    %181 = vadd.xlane.f32.xlu0 %v179
    %v182 = vpop.xlane.xlu0 %181
    %183 = vadd.xlane.f32.xlu0 %v180
    %v184 = vpop.xlane.xlu0 %183
    %185 = vxpose.xlu0.b32.start [1/16] %v182, 128
    %186 = vxpose.xlu0.b32.cont [2/16] %v184, 128
    %187 = vxpose.xlu0.b32.cont [3/16] 0.0, 128
    %188 = vxpose.xlu0.b32.cont [4/16] 0.0, 128
    %189 = vxpose.xlu0.b32.cont [5/16] 0.0, 128
    %190 = vxpose.xlu0.b32.cont [6/16] 0.0, 128
    %191 = vxpose.xlu0.b32.cont [7/16] 0.0, 128
    %192 = vxpose.xlu0.b32.cont [8/16] 0.0, 128
    %193 = vxpose.xlu0.b32.cont [9/16] 0.0, 128
    %194 = vxpose.xlu0.b32.cont [10/16] 0.0, 128
    %195 = vxpose.xlu0.b32.cont [11/16] 0.0, 128
    %196 = vxpose.xlu0.b32.cont [12/16] 0.0, 128
    %197 = vxpose.xlu0.b32.cont [13/16] 0.0, 128
    %198 = vxpose.xlu0.b32.cont [14/16] 0.0, 128
    %199 = vxpose.xlu0.b32.cont [15/16] 0.0, 128
    %200 = vxpose.xlu0.b32.end [16/16] 0.0, 128
    %v201 = vpop.trf.xlu0
    %v202 = vpop.trf.xlu0
    %v203 = vpop.trf.xlu0
    %v204 = vpop.trf.xlu0
    %v205 = vpop.trf.xlu0
    %v206 = vpop.trf.xlu0
    %v207 = vpop.trf.xlu0
    %v208 = vpop.trf.xlu0
    %v209 = vpop.trf.xlu0
    %v210 = vpop.trf.xlu0
    %v211 = vpop.trf.xlu0
    %v212 = vpop.trf.xlu0
    %v213 = vpop.trf.xlu0
    %v214 = vpop.trf.xlu0
    %v215 = vpop.trf.xlu0
    %v216 = vpop.trf.xlu0
    %v218 = vsel %vm65, %v201, 0
    %220 = vmatpush.msra.mxu0 0.0
    %221 = vmatpush.msra.mxu0 0.0
    %222 = vmatpush.msra.mxu0 0.0
    %223 = vmatpush.msra.mxu0 0.0
    %224 = vmatpush.msra.mxu0 0.0
    %225 = vmatpush.msra.mxu0 0.0
    %226 = vmatpush.msra.mxu0 0.0
    %227 = vmatpush.msra.mxu0 0.0
    %228 = vmatpush.msra.mxu0 0.0
    %229 = vmatpush.msra.mxu0 0.0
    %230 = vmatpush.msra.mxu0 0.0
    %231 = vmatpush.msra.mxu0 0.0
    %232 = vmatpush.msra.mxu0 0.0
    %233 = vmatpush.msra.mxu0 0.0
    %234 = vmatpush.msra.mxu0 %v55
    %235 = vmatpush.msra.mxu0 %v54
    %236 = vmatmul.f32.gmra.mxu0 %v218
    %v237 = vpop.f32.mrf.mxu0
    %v238 = vadd.f32 0.0, %v237
    %239 = vdwg.mxu0
    %vm240 = vcmp.gt.f32.partialorder %v238, 0.0
    %v241 = vsel %vm240, %v238, 1.0
    %v242 = vrcp.pop %v241
    %v243 = vmul.f32 %v177, %v242
    %244 = vst [vmem:[#allocation2] sm:$0x1] %v243
    // Predicated region
    $region18: #{custom_attention_layer.1} parent=1 // pred_check
      _
    $region19: #{custom_attention_layer.1} parent=1 // pred_check_branch
      %246 = sbr.rel (0) target = $region21
    $region20: #{custom_attention_layer.1} parent=1 // pred_region
      %248 = vsyncadd [#allocation3], 0
      %s250 = sshll.u32 [#allocation2], 4
      %s251 = int_to_ptr.vmem [resolvable:$true] %s250
      %s252 = sshll.u32 %s4, 4
      %s253 = int_to_ptr.hbm [resolvable:$true] %s252
      %255 = dma.vmem_to_hbm [thread:$0]  %s251, 16, %s253, [#allocation3]
    $region21: #{custom_attention_layer.1} parent=1 // pred_fallthru
      _
    // Predicated region
    $region22: #{custom_attention_layer.1} parent=1 // pred_check
      _
    $region23: #{custom_attention_layer.1} parent=1 // pred_check_branch
      %257 = sbr.rel (0) target = $region25
    $region24: #{custom_attention_layer.1} parent=1 // pred_region
      %259 = dma.done [#allocation3], 16
    $region25: #{custom_attention_layer.1} parent=1 // pred_fallthru
      _
    %260 = vsyncpa [#allocation3], 1

</llo_original>
